<compile_context>
chip_gen: v6e
topology: v6e:2x2x1
jax: 0.10.0
libtpu: 0.0.40
codegen_flags: <defaults>
</compile_context>

<pallas_src>
import jax
import jax.numpy as jnp
import numpy as np
from jax.experimental import pallas as pl
from jax.experimental.pallas import tpu as pltpu

BN_EPS = 1e-5


def _round_up(x, m):
    return (x + m - 1) // m * m


def _pick_tiles(N, Fin, Fout, R, a_itemsize):
    """Pick (TM, TK) from a generation-aware VMEM budget."""
    Finp = _round_up(Fin, 128)
    Foutp = _round_up(Fout, 128)
    Nsrc_p = _round_up(N, 128)
    Ktot = R * Nsrc_p

    try:
        vmem_cap = pltpu.get_tpu_info().vmem_capacity_bytes
    except Exception:
        vmem_cap = 64 * 1024 * 1024          # conservative default (v7x per-TC)
    budget = int(vmem_cap * 0.70)            # headroom for compiler scratch

    # dst-row tile: large (amortize ~0.35us/step + fewer HW re-streams), but
    # keep >= 2 dst tiles when N allows so the "parallel" axis spans both
    # TensorCores on v7x.
    N8 = _round_up(N, 8)
    TM = min(512, N8)
    if N8 >= 16 and -(-N8 // TM) < 2:
        TM = _round_up(-(-N8 // 2), 8)
    Ndst_p = _round_up(N, TM)

    # flattened-K tile: as big as the double-buffered VMEM budget allows.
    bf = 2  # bf16 bytes
    fixed = (2 * (TM * Finp * bf + Finp * Foutp * bf + 4 * Foutp * 4)
             + 2 * TM * Foutp * 4)
    per_tk = 2 * (TM * a_itemsize + Foutp * bf)
    tk_budget = max(128, (budget - fixed) // per_tk)
    TK = min(4096, Ktot, tk_budget)
    TK = (TK // 256) * 256 if TK >= 256 else 128   # 256-multiples feed wide MXUs
    Kp = _round_up(Ktot, TK)
    return TM, Ndst_p, TK, Kp, Finp, Foutp, Nsrc_p, budget


def _rgcn_kernel(a_ref, hw_ref, h_ref, wres_ref, ep_ref, out_ref):
    """Grid = (dst_tile i [parallel], flattened reduction tile k [arbitrary]).

    a_ref   : (TM, TK)      a_dtype  normalized adjacency tile (dst, rel*src)
    hw_ref  : (TK, Foutp)   bf16     hoisted (H @ W_r) rows for this k tile
    h_ref   : (TM, Finp)    bf16     node features of this dst tile (residual)
    wres_ref: (Finp, Foutp) bf16     residual Linear weight
    ep_ref  : (4, Foutp)    f32      rows: conv bias, res bias, BN scale, shift
    out_ref : (TM, Foutp)   f32      output block, doubles as the accumulator
    """
    k = pl.program_id(1)

    @pl.when(k == 0)
    def _():
        out_ref[...] = jnp.zeros_like(out_ref)

    # message passing: A_ik @ (H W)_k, accumulated in f32
    a = a_ref[...].astype(jnp.bfloat16)   # no-op for bf16 A; upcast for fp8 A
    out_ref[...] += jnp.dot(a, hw_ref[...], preferred_element_type=jnp.float32)

    @pl.when(k == pl.num_programs(1) - 1)
    def _():
        ep = ep_ref[...]                  # (4, Foutp)
        bias, b_res = ep[0:1, :], ep[1:2, :]
        scale, shift = ep[2:3, :], ep[3:4, :]

        # RelGraphConv: + bias, ReLU
        conv = jnp.maximum(out_ref[...] + bias, 0.0)
        # TODO(synk): RelGraphConv dropout(p=0.5) is identity in eval mode.

        # residual branch: ReLU(Linear(node_feats))
        res = jnp.dot(h_ref[...], wres_ref[...],
                      preferred_element_type=jnp.float32)
        res = jnp.maximum(res + b_res, 0.0)

        # BatchNorm1d (eval mode) folded into scale/shift
        out_ref[...] = (conv + res) * scale + shift


def rgcn_layer(node_feats, src, dst, etype, norm, params,
               a_dtype=jnp.bfloat16):
    """node_feats: (N, Fin) f32; src/dst/etype: (E,) i32; norm: (E,1) f32 or None.

    a_dtype: storage dtype of the (dominant, HBM-bound) adjacency stream.
             bf16 default; pass jnp.float8_e4m3fn on v7x to halve A bytes.
    """
    N, Fin = node_feats.shape
    W = params["W"]                       # (R, Fin, Fout)
    R, _, Fout = W.shape

    a_itemsize = jnp.dtype(a_dtype).itemsize
    (TM, Ndst_p, TK, Kp, Finp, Foutp, Nsrc_p, vmem_budget) = _pick_tiles(
        N, Fin, Fout, R, a_itemsize)

    # ---- flattened per-relation normalized adjacency (dst, rel*src) ----
    # Scatter-add directly into the final padded layout/dtype (no f32 pass).
    # TODO(synk): for truly sparse graphs (E << R*N^2) switch to an edge-list /
    # CSR kernel with scalar-prefetched per-relation offsets + gather DMAs.
    if norm is None:
        norm_flat = jnp.ones((src.shape[0],), jnp.float32)
    else:
        norm_flat = norm.reshape(-1).astype(jnp.float32)
    col = etype.astype(jnp.int32) * Nsrc_p + src.astype(jnp.int32)
    A = jnp.zeros((Ndst_p, Kp), a_dtype)
    A = A.at[dst, col].add(norm_flat.astype(a_dtype))

    # ---- hoisted H @ W_r (bf16 inputs, f32 accumulate, bf16 storage) ----
    h16 = node_feats.astype(jnp.bfloat16)
    w16 = W.astype(jnp.bfloat16)
    HW = jnp.einsum("nf,rfo->rno", h16, w16,
                    preferred_element_type=jnp.float32).astype(jnp.bfloat16)
    HW = jnp.pad(HW, ((0, 0), (0, Nsrc_p - N), (0, Foutp - Fout)))
    HW = HW.reshape(R * Nsrc_p, Foutp)
    HW = jnp.pad(HW, ((0, Kp - R * Nsrc_p), (0, 0)))

    # residual-path operands (bf16, padded; no intermediate f32 buffers)
    Hp = jnp.pad(h16, ((0, Ndst_p - N), (0, Finp - Fin)))
    Wres = jnp.pad(params["W_res"].astype(jnp.bfloat16),
                   ((0, Finp - Fin), (0, Foutp - Fout)))

    # fold BatchNorm into scale/shift; pack epilogue params into one tensor
    scale = params["gamma"] * jax.lax.rsqrt(params["running_var"] + BN_EPS)
    shift = params["beta"] - params["running_mean"] * scale
    ep = jnp.concatenate(
        [params["bias"].reshape(1, -1), params["b_res"].reshape(1, -1),
         scale.reshape(1, -1), shift.reshape(1, -1)], axis=0
    ).astype(jnp.float32)
    ep = jnp.pad(ep, ((0, 0), (0, Foutp - Fout)))

    grid = (Ndst_p // TM, Kp // TK)

    grid_spec = pltpu.PrefetchScalarGridSpec(
        num_scalar_prefetch=0,
        grid=grid,
        in_specs=[
            pl.BlockSpec((TM, TK), lambda i, k: (i, k)),        # A tile
            pl.BlockSpec((TK, Foutp), lambda i, k: (k, 0)),     # HW tile
            pl.BlockSpec((TM, Finp), lambda i, k: (i, 0)),      # H (residual)
            pl.BlockSpec((Finp, Foutp), lambda i, k: (0, 0)),   # W_res
            pl.BlockSpec((4, Foutp), lambda i, k: (0, 0)),      # epilogue params
        ],
        out_specs=pl.BlockSpec((TM, Foutp), lambda i, k: (i, 0)),
    )

    out = pl.pallas_call(
        _rgcn_kernel,
        out_shape=jax.ShapeDtypeStruct((Ndst_p, Foutp), jnp.float32),
        grid_spec=grid_spec,
        compiler_params=pltpu.CompilerParams(
            dimension_semantics=("parallel", "arbitrary"),
            vmem_limit_bytes=int(vmem_budget)),
    )(A, HW, Hp, Wres, ep)

    return out[:N, :Fout]


def _reference(node_feats, A_dense, params):
    conv = jnp.einsum("rnm,mf,rfo->no", A_dense, node_feats, params["W"])
    conv = jnp.maximum(conv + params["bias"], 0.0)
    res = jnp.maximum(node_feats @ params["W_res"] + params["b_res"], 0.0)
    y = conv + res
    inv = jax.lax.rsqrt(params["running_var"] + BN_EPS)
    return (y - params["running_mean"]) * inv * params["gamma"] + params["beta"]


if __name__ == "__main__":
    N, Fin, Fout, R, E = 16, 32, 32, 8, 40   # small synthetic graph

    key = jax.random.PRNGKey(0)
    ks = jax.random.split(key, 10)

    node_feats = jax.random.normal(ks[0], (N, Fin), jnp.float32)
    src = jax.random.randint(ks[1], (E,), 0, N, jnp.int32)
    dst = jax.random.randint(ks[2], (E,), 0, N, jnp.int32)
    etype = jax.random.randint(ks[3], (E,), 0, R, jnp.int32)
    norm = jax.random.uniform(ks[4], (E, 1), jnp.float32, 0.1, 1.0)

    params = {
        "W": 0.1 * jax.random.normal(ks[5], (R, Fin, Fout), jnp.float32),
        "bias": 0.1 * jax.random.normal(ks[6], (1, Fout), jnp.float32),
        "W_res": 0.1 * jax.random.normal(ks[7], (Fin, Fout), jnp.float32),
        "b_res": 0.1 * jax.random.normal(ks[8], (1, Fout), jnp.float32),
        "gamma": jnp.ones((1, Fout), jnp.float32),
        "beta": jnp.zeros((1, Fout), jnp.float32),
        "running_mean": 0.1 * jax.random.normal(ks[9], (1, Fout), jnp.float32),
        "running_var": jnp.full((1, Fout), 1.0, jnp.float32),
    }

    out = jax.block_until_ready(
        rgcn_layer(node_feats, src, dst, etype, norm, params))

    # correctness check against plain-JAX f32 reference (kernel uses bf16
    # storage with f32 accumulation, hence the loosened tolerance)
    norm_flat = norm.reshape(-1)
    A_ref = jnp.zeros((R, N, N), jnp.float32).at[etype, dst, src].add(norm_flat)
    ref = _reference(node_feats, A_ref, params)
    np.testing.assert_allclose(np.asarray(out), np.asarray(ref),
                               rtol=3e-2, atol=3e-2)

    print("KERNEL_OK")
</pallas_src>

<mosaic_0001>
module attributes {stable_mosaic.version = 11 : i64} {
  func.func @_rgcn_kernel(%arg0: i32, %arg1: i32, %arg2: memref<8x1024xbf16, #tpu.memory_space<vmem>>, %arg3: memref<1024x128xbf16, #tpu.memory_space<vmem>>, %arg4: memref<8x128xbf16, #tpu.memory_space<vmem>>, %arg5: memref<128x128xbf16, #tpu.memory_space<vmem>>, %arg6: memref<4x128xf32, #tpu.memory_space<vmem>>, %arg7: memref<8x128xf32, #tpu.memory_space<vmem>>) attributes {dimension_semantics = [#tpu.dimension_semantics<parallel>, #tpu.dimension_semantics<arbitrary>], iteration_bounds = array<i64: 2, 1>, scalar_prefetch = 0 : i64, scratch_operands = 0 : i64, tpu.core_type = #tpu.core_type<tc>, window_params = [{transform_indices = @transform_0, window_bounds = array<i64: 8, 1024>}, {transform_indices = @transform_1, window_bounds = array<i64: 1024, 128>}, {transform_indices = @transform_2, window_bounds = array<i64: 8, 128>}, {pipeline_mode = #tpu.pipeline_mode<synchronous>, transform_indices = @transform_3, window_bounds = array<i64: 128, 128>}, {pipeline_mode = #tpu.pipeline_mode<synchronous>, transform_indices = @transform_4, window_bounds = array<i64: 4, 128>}, {transform_indices = @transform_5, window_bounds = array<i64: 8, 128>}]} {
    %c0_i32 = arith.constant 0 : i32
    %0 = arith.cmpi eq, %arg1, %c0_i32 : i32
    %1 = arith.extui %0 : i1 to i32
    %c0_i32_0 = arith.constant 0 : i32
    %2 = arith.cmpi ne, %1, %c0_i32_0 : i32
    scf.if %2 {
      %cst_10 = arith.constant 0.000000e+00 : f32
      %12 = vector.broadcast %cst_10 : f32 to vector<8x128xf32>
      %c0_11 = arith.constant 0 : index
      %c0_12 = arith.constant 0 : index
      %13 = vector.load %arg7[%c0_11, %c0_12] : memref<8x128xf32, #tpu.memory_space<vmem>>, vector<8x128xf32>
      tpu.vector_store %arg7[%c0_11, %c0_12], %12 {strides = array<i32>} : memref<8x128xf32, #tpu.memory_space<vmem>>, vector<8x128xf32>,
    } else {
    }
    %c0 = arith.constant 0 : index
    %c0_1 = arith.constant 0 : index
    %3 = vector.load %arg2[%c0, %c0_1] : memref<8x1024xbf16, #tpu.memory_space<vmem>>, vector<8x1024xbf16>
    %c0_2 = arith.constant 0 : index
    %c0_3 = arith.constant 0 : index
    %4 = vector.load %arg7[%c0_2, %c0_3] : memref<8x128xf32, #tpu.memory_space<vmem>>, vector<8x128xf32>
    %c0_4 = arith.constant 0 : index
    %c0_5 = arith.constant 0 : index
    %5 = vector.load %arg3[%c0_4, %c0_5] : memref<1024x128xbf16, #tpu.memory_space<vmem>>, vector<1024x128xbf16>
    %cst = arith.constant dense<0.000000e+00> : vector<8x128xf32>
    %6 = tpu.matmul %3, %5, %cst {dimension_numbers = #tpu.dot_dimension_numbers<[1], [0], [0], [1], [0, 0, 1, 1], [], []>} : vector<8x1024xbf16>, vector<1024x128xbf16>, vector<8x128xf32> -> vector<8x128xf32>
    %7 = arith.addf %4, %6 : vector<8x128xf32>
    %c0_6 = arith.constant 0 : index
    %c0_7 = arith.constant 0 : index
    %8 = vector.load %arg7[%c0_6, %c0_7] : memref<8x128xf32, #tpu.memory_space<vmem>>, vector<8x128xf32>
    tpu.vector_store %arg7[%c0_6, %c0_7], %7 {strides = array<i32>} : memref<8x128xf32, #tpu.memory_space<vmem>>, vector<8x128xf32>,
    %c0_i32_8 = arith.constant 0 : i32
    %9 = arith.cmpi eq, %arg1, %c0_i32_8 : i32
    %10 = arith.extui %9 : i1 to i32
    %c0_i32_9 = arith.constant 0 : i32
    %11 = arith.cmpi ne, %10, %c0_i32_9 : i32
    scf.if %11 {
      %c0_10 = arith.constant 0 : index
      %c0_11 = arith.constant 0 : index
      %12 = vector.load %arg6[%c0_10, %c0_11] : memref<4x128xf32, #tpu.memory_space<vmem>>, vector<4x128xf32>
      %13 = vector.extract_strided_slice %12 {offsets = [0, 0], sizes = [1, 128], strides = [1, 1]} : vector<4x128xf32> to vector<1x128xf32>
      %14 = vector.extract_strided_slice %12 {offsets = [1, 0], sizes = [1, 128], strides = [1, 1]} : vector<4x128xf32> to vector<1x128xf32>
      %15 = vector.extract_strided_slice %12 {offsets = [2, 0], sizes = [1, 128], strides = [1, 1]} : vector<4x128xf32> to vector<1x128xf32>
      %16 = vector.extract_strided_slice %12 {offsets = [3, 0], sizes = [1, 128], strides = [1, 1]} : vector<4x128xf32> to vector<1x128xf32>
      %c0_12 = arith.constant 0 : index
      %c0_13 = arith.constant 0 : index
      %17 = vector.load %arg7[%c0_12, %c0_13] : memref<8x128xf32, #tpu.memory_space<vmem>>, vector<8x128xf32>
      %18 = vector.broadcast %13 : vector<1x128xf32> to vector<8x128xf32>
      %19 = arith.addf %17, %18 : vector<8x128xf32>
      %cst_14 = arith.constant 0.000000e+00 : f32
      %20 = vector.broadcast %cst_14 : f32 to vector<8x128xf32>
      %21 = arith.maximumf %19, %20 : vector<8x128xf32>
      %c0_15 = arith.constant 0 : index
      %c0_16 = arith.constant 0 : index
      %22 = vector.load %arg4[%c0_15, %c0_16] : memref<8x128xbf16, #tpu.memory_space<vmem>>, vector<8x128xbf16>
      %c0_17 = arith.constant 0 : index
      %c0_18 = arith.constant 0 : index
      %23 = vector.load %arg5[%c0_17, %c0_18] : memref<128x128xbf16, #tpu.memory_space<vmem>>, vector<128x128xbf16>
      %cst_19 = arith.constant dense<0.000000e+00> : vector<8x128xf32>
      %24 = tpu.matmul %22, %23, %cst_19 {dimension_numbers = #tpu.dot_dimension_numbers<[1], [0], [0], [1], [0, 0, 1, 1], [], []>} : vector<8x128xbf16>, vector<128x128xbf16>, vector<8x128xf32> -> vector<8x128xf32>
      %25 = vector.broadcast %14 : vector<1x128xf32> to vector<8x128xf32>
      %26 = arith.addf %24, %25 : vector<8x128xf32>
      %cst_20 = arith.constant 0.000000e+00 : f32
      %27 = vector.broadcast %cst_20 : f32 to vector<8x128xf32>
      %28 = arith.maximumf %26, %27 : vector<8x128xf32>
      %29 = arith.addf %21, %28 : vector<8x128xf32>
      %30 = vector.broadcast %15 : vector<1x128xf32> to vector<8x128xf32>
      %31 = arith.mulf %29, %30 : vector<8x128xf32>
      %32 = vector.broadcast %16 : vector<1x128xf32> to vector<8x128xf32>
      %33 = arith.addf %31, %32 : vector<8x128xf32>
      %c0_21 = arith.constant 0 : index
      %c0_22 = arith.constant 0 : index
      %34 = vector.load %arg7[%c0_21, %c0_22] : memref<8x128xf32, #tpu.memory_space<vmem>>, vector<8x128xf32>
      tpu.vector_store %arg7[%c0_21, %c0_22], %33 {strides = array<i32>} : memref<8x128xf32, #tpu.memory_space<vmem>>, vector<8x128xf32>,
    } else {
    }
    return
  }
  func.func @transform_0(%arg0: i32, %arg1: i32) -> (i32, i32) {
    %c0_i32 = arith.constant 0 : i32
    return %arg0, %arg1 : i32, i32
  }
  func.func @transform_1(%arg0: i32, %arg1: i32) -> (i32, i32) {
    %c0_i32 = arith.constant 0 : i32
    %c0_i32_0 = arith.constant 0 : i32
    return %arg1, %c0_i32 : i32, i32
  }
  func.func @transform_2(%arg0: i32, %arg1: i32) -> (i32, i32) {
    %c0_i32 = arith.constant 0 : i32
    %c0_i32_0 = arith.constant 0 : i32
    return %arg0, %c0_i32 : i32, i32
  }
  func.func @transform_3(%arg0: i32, %arg1: i32) -> (i32, i32) {
    %c0_i32 = arith.constant 0 : i32
    %c0_i32_0 = arith.constant 0 : i32
    %c0_i32_1 = arith.constant 0 : i32
    return %c0_i32, %c0_i32_0 : i32, i32
  }
  func.func @transform_4(%arg0: i32, %arg1: i32) -> (i32, i32) {
    %c0_i32 = arith.constant 0 : i32
    %c0_i32_0 = arith.constant 0 : i32
    %c0_i32_1 = arith.constant 0 : i32
    return %c0_i32, %c0_i32_0 : i32, i32
  }
  func.func @transform_5(%arg0: i32, %arg1: i32) -> (i32, i32) {
    %c0_i32 = arith.constant 0 : i32
    %c0_i32_0 = arith.constant 0 : i32
    return %arg0, %c0_i32 : i32, i32
  }
}

</mosaic_0001>

<llo_original>
// kernel: tpu_custom_call.1
$region0: #{tpu_custom_call.1}
  #allocation0 [shape = 'u32[]', space=smem, size = 0x4, offset = 0x4, fixed_abs, tag = 'smem constant byte address 0x4 - core index']
  #allocation1 [shape = 'u32[144,128]{1,0:T(1,128)}', space=vmem, size = 0x12000, scoped, tag = 'internal scratch']
  %s0 = inlined_call_operand.hbm [shape: bf16[16,1024], index: 0, kind: input, shape index: {}]
  %s1 = inlined_call_operand.hbm [shape: bf16[1024,128], index: 1, kind: input, shape index: {}]
  %s2 = inlined_call_operand.hbm [shape: bf16[16,128], index: 2, kind: input, shape index: {}]
  %s3 = inlined_call_operand.hbm [shape: bf16[128,128], index: 3, kind: input, shape index: {}]
  %s4 = inlined_call_operand.vmem [shape: f32[4,128], index: 4, kind: input, shape index: {}]
  %s5 = inlined_call_operand.hbm [shape: f32[16,128], index: 5, kind: output, shape index: {}]
  %s6 = sld [smem:[#allocation0]]
  $region77: #{tpu_custom_call.1} parent=0
    _
  %s8 = ssub.s32 1, %s6
  %s9 = scalar_select 0, %s8, %s6
  $region1: #{tpu_custom_call.1} parent=0
    #allocation2 [shape = 'u8[32768]{0}', space=vmem, size = 0x8000, scoped, tag = 'input window, operand 0']
    #allocation3 [shape = 's32[2]{0}', space=sflag, size = 0x8, scoped, tag = 'scoped memory for tpu_custom_call.1']
    #allocation4 [shape = 's32[2]{0}', space=sflag, size = 0x8, scoped, tag = 'scoped memory for tpu_custom_call.1']
    #allocation5 [shape = 'u8[262144]{0}', space=vmem, size = 0x40000, scoped, tag = 'input window, operand 1, single buffered']
    #allocation6 [shape = 's32[1]{0}', space=sflag, size = 0x4, scoped, tag = 'scoped memory for tpu_custom_call.1']
    #allocation7 [shape = 'u8[4096]{0}', space=vmem, size = 0x1000, scoped, tag = 'input window, operand 2']
    #allocation8 [shape = 'u8[32768]{0}', space=vmem, size = 0x8000, scoped, tag = 'input window, operand 3, single buffered']
    #allocation9 [shape = 'u8[8192]{0}', space=vmem, size = 0x2000, scoped, tag = 'output window, operand 0']
    %10 = vsyncpa [#allocation3], 0
    %s11 = scalar_lea.sflag [#allocation3], 1
    %12 = vsyncpa %s11, 0
    %13 = vsyncpa [#allocation6], 0
    %14 = vsyncpa [#allocation4], 0
    %s15 = scalar_lea.sflag [#allocation4], 1
    %16 = vsyncpa %s15, 0
    loop: start=0, step=1, limit=4
    $region2: #{tpu_custom_call.1} parent=1 // loop_pre_header
      _
    $region3: #{tpu_custom_call.1} parent=1 // loop_header
      %s18 = sphi 0, %s22
      %p19 = scmp.ge.s32.totalorder %s18, 4
      %s25 = sphi 0, %s37
      %s26 = sphi 0, %s33
      %s27 = sphi 0, %s25
      %s28 = sphi 0, %s26
      %s29 = sphi 0, %s27
      %s30 = sphi 0, %s28
      %s42 = sphi 0, %s44
      %s45 = sphi 0, %s42
      %s46 = sphi 0, %s45
      %s62 = sphi 0, %s46
      %s68 = sphi 0, %s70
      %s71 = sphi 0, %s68
      %s72 = sphi 0, %s71
      %s88 = sphi 0, %s72
      %s94 = sphi 0, %s96
      %s97 = sphi 0, %s94
      %s98 = sphi 0, %s97
      %s114 = sphi 0, %s98
      %s118 = sphi 0, %s118
      %s120 = sphi 0, %s118
      %s121 = sphi 0, %s120
      %s135 = sphi 0, %s121
      %s139 = sphi 0, %s139
      %s141 = sphi 0, %s139
      %s142 = sphi 0, %s141
      %s156 = sphi 0, %s142
      %s162 = sphi 0, %s164
      %s165 = sphi 0, %s162
      %s166 = sphi 0, %s165
      %s182 = sphi 0, %s166
    $region4: #{tpu_custom_call.1} parent=1 // loop_header_branch
      %21 = sbr.rel (%p19) target = $region8
    $region5: #{tpu_custom_call.1} parent=1 // loop_body
      %s23 = ssub.s32 %s18, 1
      %s24 = ssub.s32 %s18, 2
      %s31 = sadd.s32 1, %s26
      %p32 = scmp.ge.s32.totalorder %s31, 1
      %s33 = scalar_select %p32, 0, %s31
      %s34 = sadd.s32 1, %s25
      %s35 = scalar_select %p32, %s34, %s25
      %p36 = scmp.ge.s32.totalorder %s35, 2
      %s37 = scalar_select %p36, 0, %s35
      %s38 = ssub.s32 %s25, %s37
      %s39 = ssub.s32 %s26, %s33
      %s40 = sor.u32 %s38, %s39
      %p41 = scmp.eq.s32.totalorder %s40, 0
      %s43 = sadd.s32 %s42, 1
      %s44 = scalar_select %p41, %s42, %s43
      %p47 = pneg %p41
      %p48 = scmp.eq.s32.totalorder %s18, 1
      %p49 = por %p47, %p48
      %p50 = scmp.ne.s32.totalorder %s42, %s45
      %p51 = scmp.eq.s32.totalorder %s18, 0
      %p52 = por %p50, %p51
      %p53 = scmp.ne.s32.totalorder %s42, %s45
      %p54 = scmp.eq.s32.totalorder %s23, 1
      %p55 = por %p53, %p54
      %p56 = scmp.ne.s32.totalorder %s45, %s46
      %p57 = scmp.eq.s32.totalorder %s23, 0
      %p58 = por %p56, %p57
      %p59 = scmp.ne.s32.totalorder %s45, %s46
      %p60 = scmp.eq.s32.totalorder %s24, 1
      %p61 = por %p59, %p60
      %p63 = scmp.ne.s32.totalorder %s46, %s62
      %p64 = scmp.eq.s32.totalorder %s24, 0
      %p65 = por %p63, %p64
      %s66 = ssub.s32 %s26, %s33
      %p67 = scmp.eq.s32.totalorder %s66, 0
      %s69 = sadd.s32 %s68, 1
      %s70 = scalar_select %p67, %s68, %s69
      %p73 = pneg %p67
      %p74 = scmp.eq.s32.totalorder %s18, 1
      %p75 = por %p73, %p74
      %p76 = scmp.ne.s32.totalorder %s68, %s71
      %p77 = scmp.eq.s32.totalorder %s18, 0
      %p78 = por %p76, %p77
      %p79 = scmp.ne.s32.totalorder %s68, %s71
      %p80 = scmp.eq.s32.totalorder %s23, 1
      %p81 = por %p79, %p80
      %p82 = scmp.ne.s32.totalorder %s71, %s72
      %p83 = scmp.eq.s32.totalorder %s23, 0
      %p84 = por %p82, %p83
      %p85 = scmp.ne.s32.totalorder %s71, %s72
      %p86 = scmp.eq.s32.totalorder %s24, 1
      %p87 = por %p85, %p86
      %p89 = scmp.ne.s32.totalorder %s72, %s88
      %p90 = scmp.eq.s32.totalorder %s24, 0
      %p91 = por %p89, %p90
      %s92 = ssub.s32 %s25, %s37
      %p93 = scmp.eq.s32.totalorder %s92, 0
      %s95 = sadd.s32 %s94, 1
      %s96 = scalar_select %p93, %s94, %s95
      %p99 = pneg %p93
      %p100 = scmp.eq.s32.totalorder %s18, 1
      %p101 = por %p99, %p100
      %p102 = scmp.ne.s32.totalorder %s94, %s97
      %p103 = scmp.eq.s32.totalorder %s18, 0
      %p104 = por %p102, %p103
      %p105 = scmp.ne.s32.totalorder %s94, %s97
      %p106 = scmp.eq.s32.totalorder %s23, 1
      %p107 = por %p105, %p106
      %p108 = scmp.ne.s32.totalorder %s97, %s98
      %p109 = scmp.eq.s32.totalorder %s23, 0
      %p110 = por %p108, %p109
      %p111 = scmp.ne.s32.totalorder %s97, %s98
      %p112 = scmp.eq.s32.totalorder %s24, 1
      %p113 = por %p111, %p112
      %p115 = scmp.ne.s32.totalorder %s98, %s114
      %p116 = scmp.eq.s32.totalorder %s24, 0
      %p117 = por %p115, %p116
      %s119 = sadd.s32 %s118, 1
      %p122 = scmp.eq.s32.totalorder %s18, 1
      %p123 = scmp.ne.s32.totalorder %s118, %s120
      %p124 = scmp.eq.s32.totalorder %s18, 0
      %p125 = por %p123, %p124
      %p126 = scmp.ne.s32.totalorder %s118, %s120
      %p127 = scmp.eq.s32.totalorder %s23, 1
      %p128 = por %p126, %p127
      %p129 = scmp.ne.s32.totalorder %s120, %s121
      %p130 = scmp.eq.s32.totalorder %s23, 0
      %p131 = por %p129, %p130
      %p132 = scmp.ne.s32.totalorder %s120, %s121
      %p133 = scmp.eq.s32.totalorder %s24, 1
      %p134 = por %p132, %p133
      %p136 = scmp.ne.s32.totalorder %s121, %s135
      %p137 = scmp.eq.s32.totalorder %s24, 0
      %p138 = por %p136, %p137
      %s140 = sadd.s32 %s139, 1
      %p143 = scmp.eq.s32.totalorder %s18, 1
      %p144 = scmp.ne.s32.totalorder %s139, %s141
      %p145 = scmp.eq.s32.totalorder %s18, 0
      %p146 = por %p144, %p145
      %p147 = scmp.ne.s32.totalorder %s139, %s141
      %p148 = scmp.eq.s32.totalorder %s23, 1
      %p149 = por %p147, %p148
      %p150 = scmp.ne.s32.totalorder %s141, %s142
      %p151 = scmp.eq.s32.totalorder %s23, 0
      %p152 = por %p150, %p151
      %p153 = scmp.ne.s32.totalorder %s141, %s142
      %p154 = scmp.eq.s32.totalorder %s24, 1
      %p155 = por %p153, %p154
      %p157 = scmp.ne.s32.totalorder %s142, %s156
      %p158 = scmp.eq.s32.totalorder %s24, 0
      %p159 = por %p157, %p158
      %s160 = ssub.s32 %s25, %s37
      %p161 = scmp.eq.s32.totalorder %s160, 0
      %s163 = sadd.s32 %s162, 1
      %s164 = scalar_select %p161, %s162, %s163
      %p167 = pneg %p161
      %p168 = scmp.eq.s32.totalorder %s18, 1
      %p169 = por %p167, %p168
      %p170 = scmp.ne.s32.totalorder %s162, %s165
      %p171 = scmp.eq.s32.totalorder %s18, 0
      %p172 = por %p170, %p171
      %p173 = scmp.ne.s32.totalorder %s162, %s165
      %p174 = scmp.eq.s32.totalorder %s23, 1
      %p175 = por %p173, %p174
      %p176 = scmp.ne.s32.totalorder %s165, %s166
      %p177 = scmp.eq.s32.totalorder %s23, 0
      %p178 = por %p176, %p177
      %p179 = scmp.ne.s32.totalorder %s165, %s166
      %p180 = scmp.eq.s32.totalorder %s24, 1
      %p181 = por %p179, %p180
      %p183 = scmp.ne.s32.totalorder %s166, %s182
      %p184 = scmp.eq.s32.totalorder %s24, 0
      %p185 = por %p183, %p184
      %p186 = scmp.le.s32.totalorder 1, %s18
      %p187 = scmp.lt.s32.totalorder %s18, 3
      %p188 = pnand %p186, %p187
      %p189 = pneg %p188
      // Predicated region
      $region9: #{tpu_custom_call.1} parent=5 // pred_check
        _
      $region10: #{tpu_custom_call.1} parent=5 // pred_check_branch
        %191 = sbr.rel (%p188) target = $region12
      $region11: #{tpu_custom_call.1} parent=5 // pred_region
        %s192 = ssub.s32 %s18, 1
        // Predicated region
        $region13: #{tpu_custom_call.1} parent=11 // pred_check
          %p193 = pneg %p84
        $region14: #{tpu_custom_call.1} parent=11 // pred_check_branch
          %195 = sbr.rel (%p193) target = $region16
        $region15: #{tpu_custom_call.1} parent=11 // pred_region
          %s196 = smul.u32 128, %s28
          %s198 = ssub.s32 8192, 8192
          %199 = vsyncadd [#allocation6], %s198
          %s200 = smul.addr %s196, 64
          %s201 = scalar_lea.hbm %s1, %s200
          %s202 = sshll.u32 [#allocation5], 4
          %s203 = int_to_ptr.vmem [resolvable:$true] %s202
          %208 = dma.hbm_to_vmem [thread:$0]  %s201, 8192, %s203, [#allocation6], 64, 64, 4
        $region16: #{tpu_custom_call.1} parent=11 // pred_fallthru
          _
        // Predicated region
        $region17: #{tpu_custom_call.1} parent=11 // pred_check
          %p209 = pneg %p131
        $region18: #{tpu_custom_call.1} parent=11 // pred_check_branch
          %211 = sbr.rel (%p209) target = $region20
        $region19: #{tpu_custom_call.1} parent=11 // pred_region
          %s213 = ssub.s32 1024, 1024
          %214 = vsyncadd [#allocation6], %s213
          %s215 = sshll.u32 [#allocation8], 4
          %s216 = int_to_ptr.vmem [resolvable:$true] %s215
          %221 = dma.hbm_to_vmem [thread:$0]  %s3, 1024, %s216, [#allocation6], 64, 64, 4
        $region20: #{tpu_custom_call.1} parent=11 // pred_fallthru
          _
        // Predicated region
        $region21: #{tpu_custom_call.1} parent=11 // pred_check
          %p222 = pneg %p152
        $region22: #{tpu_custom_call.1} parent=11 // pred_check_branch
          %224 = sbr.rel (%p222) target = $region24
        $region23: #{tpu_custom_call.1} parent=11 // pred_region
          _
        $region24: #{tpu_custom_call.1} parent=11 // pred_fallthru
          _
      $region12: #{tpu_custom_call.1} parent=5 // pred_fallthru
        _
      %p225 = scmp.lt.s32.totalorder %s18, 2
      // Predicated region
      $region25: #{tpu_custom_call.1} parent=5 // pred_check
        %p226 = pneg %p225
      $region26: #{tpu_custom_call.1} parent=5 // pred_check_branch
        %228 = sbr.rel (%p226) target = $region28
      $region27: #{tpu_custom_call.1} parent=5 // pred_region
        // Predicated region
        $region29: #{tpu_custom_call.1} parent=27 // pred_check
          %p229 = pneg %p52
        $region30: #{tpu_custom_call.1} parent=27 // pred_check_branch
          %231 = sbr.rel (%p229) target = $region32
        $region31: #{tpu_custom_call.1} parent=27 // pred_region
          %s232 = sand.u32 %s18, 1
          %s233 = scalar_lea.sflag [#allocation3], %s232
          %s234 = sand.u32 %s42, 1
          %s235 = smul.addr %s234, 32
          %s236 = scalar_lea.vmem [#allocation2], %s235
          %s237 = smul.u32 8, %s26
          %s239 = ssub.s32 512, 512
          %240 = vsyncadd %s233, %s239
          %s241 = smul.addr %s25, 8
          %s242 = sadd.s32 %s237, %s241
          %s243 = smul.addr %s242, 64
          %s244 = scalar_lea.hbm %s0, %s243
          %s246 = sshll.u32 %s236, 4
          %s247 = int_to_ptr.vmem [resolvable:$true] %s246
          %249 = dma.hbm_to_vmem [thread:$0]  %s244, 512, %s247, %s233
        $region32: #{tpu_custom_call.1} parent=27 // pred_fallthru
          _
        // Predicated region
        $region33: #{tpu_custom_call.1} parent=27 // pred_check
          %p250 = pneg %p104
        $region34: #{tpu_custom_call.1} parent=27 // pred_check_branch
          %252 = sbr.rel (%p250) target = $region36
        $region35: #{tpu_custom_call.1} parent=27 // pred_region
          %s253 = sand.u32 %s18, 1
          %s254 = scalar_lea.sflag [#allocation3], %s253
          %s255 = sand.u32 %s94, 1
          %s256 = smul.addr %s255, 4
          %s257 = scalar_lea.vmem [#allocation7], %s256
          %s259 = ssub.s32 64, 64
          %260 = vsyncadd %s254, %s259
          %s261 = smul.addr %s25, 64
          %s262 = scalar_lea.hbm %s2, %s261
          %s264 = sshll.u32 %s257, 4
          %s265 = int_to_ptr.vmem [resolvable:$true] %s264
          %267 = dma.hbm_to_vmem [thread:$0]  %s262, 64, %s265, %s254
        $region36: #{tpu_custom_call.1} parent=27 // pred_fallthru
          _
      $region28: #{tpu_custom_call.1} parent=5 // pred_fallthru
        _
      %p268 = scmp.le.s32.totalorder 1, %s18
      %p269 = scmp.lt.s32.totalorder %s18, 3
      %p270 = pnand %p268, %p269
      %p271 = pneg %p270
      // Predicated region
      $region37: #{tpu_custom_call.1} parent=5 // pred_check
        _
      $region38: #{tpu_custom_call.1} parent=5 // pred_check_branch
        %273 = sbr.rel (%p270) target = $region40
      $region39: #{tpu_custom_call.1} parent=5 // pred_region
        %s274 = ssub.s32 %s18, 1
        %s275 = sand.u32 %s23, 1
        %s276 = scalar_lea.sflag [#allocation3], %s275
        %s277 = sand.u32 %s45, 1
        %s278 = smul.addr %s277, 32
        %s279 = scalar_lea.vmem [#allocation2], %s278
        // Predicated region
        $region41: #{tpu_custom_call.1} parent=39 // pred_check
          %p280 = pneg %p58
        $region42: #{tpu_custom_call.1} parent=39 // pred_check_branch
          %282 = sbr.rel (%p280) target = $region44
        $region43: #{tpu_custom_call.1} parent=39 // pred_region
          %283 = dma.done %s276, 512
        $region44: #{tpu_custom_call.1} parent=39 // pred_fallthru
          _
        // Predicated region
        $region45: #{tpu_custom_call.1} parent=39 // pred_check
          %p284 = pneg %p84
        $region46: #{tpu_custom_call.1} parent=39 // pred_check_branch
          %286 = sbr.rel (%p284) target = $region48
        $region47: #{tpu_custom_call.1} parent=39 // pred_region
          %287 = dma.done [#allocation6], 8192
        $region48: #{tpu_custom_call.1} parent=39 // pred_fallthru
          _
        %s288 = sand.u32 %s23, 1
        %s289 = scalar_lea.sflag [#allocation3], %s288
        %s290 = sand.u32 %s97, 1
        %s291 = smul.addr %s290, 4
        %s292 = scalar_lea.vmem [#allocation7], %s291
        // Predicated region
        $region49: #{tpu_custom_call.1} parent=39 // pred_check
          %p293 = pneg %p110
        $region50: #{tpu_custom_call.1} parent=39 // pred_check_branch
          %295 = sbr.rel (%p293) target = $region52
        $region51: #{tpu_custom_call.1} parent=39 // pred_region
          %296 = dma.done %s289, 64
        $region52: #{tpu_custom_call.1} parent=39 // pred_fallthru
          _
        // Predicated region
        $region53: #{tpu_custom_call.1} parent=39 // pred_check
          %p297 = pneg %p131
        $region54: #{tpu_custom_call.1} parent=39 // pred_check_branch
          %299 = sbr.rel (%p297) target = $region56
        $region55: #{tpu_custom_call.1} parent=39 // pred_region
          %300 = dma.done [#allocation6], 1024
        $region56: #{tpu_custom_call.1} parent=39 // pred_fallthru
          _
        %s301 = sand.u32 %s23, 1
        %s302 = scalar_lea.sflag [#allocation3], %s301
        %s303 = sand.u32 %s45, 1
        %s304 = smul.addr %s303, 32
        %s305 = scalar_lea.vmem [#allocation2], %s304
        %p306 = pneg %p58
        %p307 = pneg %p55
        %p308 = pneg %p84
        %p309 = pneg %p81
        %s310 = sand.u32 %s23, 1
        %s311 = scalar_lea.sflag [#allocation3], %s310
        %s312 = sand.u32 %s97, 1
        %s313 = smul.addr %s312, 4
        %s314 = scalar_lea.vmem [#allocation7], %s313
        %p315 = pneg %p110
        %p316 = pneg %p107
        %p317 = pneg %p131
        %p318 = pneg %p128
        %p319 = pneg %p152
        %p320 = pneg %p149
        %p321 = pneg %p178
        %p322 = pneg %p175
        %s323 = sand.u32 %s165, 1
        %s324 = scalar_lea.sflag [#allocation4], %s323
        %s325 = sand.u32 %s165, 1
        %s326 = smul.addr %s325, 8
        %s327 = scalar_lea.vmem [#allocation9], %s326
        %s328 = smul.u32 8, %s28
        %s329 = smul.u32 128, %s28
        %p331 = scmp.eq.s32.totalorder %s28, 0
        // Predicated region
        $region57: #{tpu_custom_call.1} parent=39 // pred_check
          %p332 = pneg %p331
        $region58: #{tpu_custom_call.1} parent=39 // pred_check_branch
          %334 = sbr.rel (%p332) target = $region60
        $region59: #{tpu_custom_call.1} parent=39 // pred_region
          %335 = vst [vmem:[%s327] sm:$0xff] 0.0
        $region60: #{tpu_custom_call.1} parent=39 // pred_fallthru
          _
        %v336 = vld [vmem:[%s279] sm:$0xff]
        %v337 = vld [vmem:[%s279 + $0x8] sm:$0xff]
        %v338 = vld [vmem:[%s279 + $0x10] sm:$0xff]
        %v339 = vld [vmem:[%s279 + $0x18] sm:$0xff]
        %v340 = vld [vmem:[%s327] sm:$0xff]
        %v341 = vld [vmem:[#allocation5] sm:$0xf]
        %v342 = vld [vmem:[#allocation5 + $0x4] sm:$0xf]
        %v343 = vld [vmem:[#allocation5 + $0x8] sm:$0xf]
        %v344 = vld [vmem:[#allocation5 + $0xc] sm:$0xf]
        %v345 = vld [vmem:[#allocation5 + $0x10] sm:$0xf]
        %v346 = vld [vmem:[#allocation5 + $0x14] sm:$0xf]
        %v347 = vld [vmem:[#allocation5 + $0x18] sm:$0xf]
        %v348 = vld [vmem:[#allocation5 + $0x1c] sm:$0xf]
        %v349 = vld [vmem:[#allocation5 + $0x20] sm:$0xf]
        %v350 = vld [vmem:[#allocation5 + $0x24] sm:$0xf]
        %v351 = vld [vmem:[#allocation5 + $0x28] sm:$0xf]
        %v352 = vld [vmem:[#allocation5 + $0x2c] sm:$0xf]
        %v353 = vld [vmem:[#allocation5 + $0x30] sm:$0xf]
        %v354 = vld [vmem:[#allocation5 + $0x34] sm:$0xf]
        %v355 = vld [vmem:[#allocation5 + $0x38] sm:$0xf]
        %v356 = vld [vmem:[#allocation5 + $0x3c] sm:$0xf]
        %v357 = vld [vmem:[#allocation5 + $0x40] sm:$0xf]
        %v358 = vld [vmem:[#allocation5 + $0x44] sm:$0xf]
        %v359 = vld [vmem:[#allocation5 + $0x48] sm:$0xf]
        %v360 = vld [vmem:[#allocation5 + $0x4c] sm:$0xf]
        %v361 = vld [vmem:[#allocation5 + $0x50] sm:$0xf]
        %v362 = vld [vmem:[#allocation5 + $0x54] sm:$0xf]
        %v363 = vld [vmem:[#allocation5 + $0x58] sm:$0xf]
        %v364 = vld [vmem:[#allocation5 + $0x5c] sm:$0xf]
        %v365 = vld [vmem:[#allocation5 + $0x60] sm:$0xf]
        %v366 = vld [vmem:[#allocation5 + $0x64] sm:$0xf]
        %v367 = vld [vmem:[#allocation5 + $0x68] sm:$0xf]
        %v368 = vld [vmem:[#allocation5 + $0x6c] sm:$0xf]
        %v369 = vld [vmem:[#allocation5 + $0x70] sm:$0xf]
        %v370 = vld [vmem:[#allocation5 + $0x74] sm:$0xf]
        %v371 = vld [vmem:[#allocation5 + $0x78] sm:$0xf]
        %v372 = vld [vmem:[#allocation5 + $0x7c] sm:$0xf]
        %v373 = vld [vmem:[#allocation5 + $0x80] sm:$0xf]
        %v374 = vld [vmem:[#allocation5 + $0x84] sm:$0xf]
        %v375 = vld [vmem:[#allocation5 + $0x88] sm:$0xf]
        %v376 = vld [vmem:[#allocation5 + $0x8c] sm:$0xf]
        %v377 = vld [vmem:[#allocation5 + $0x90] sm:$0xf]
        %v378 = vld [vmem:[#allocation5 + $0x94] sm:$0xf]
        %v379 = vld [vmem:[#allocation5 + $0x98] sm:$0xf]
        %v380 = vld [vmem:[#allocation5 + $0x9c] sm:$0xf]
        %v381 = vld [vmem:[#allocation5 + $0xa0] sm:$0xf]
        %v382 = vld [vmem:[#allocation5 + $0xa4] sm:$0xf]
        %v383 = vld [vmem:[#allocation5 + $0xa8] sm:$0xf]
        %v384 = vld [vmem:[#allocation5 + $0xac] sm:$0xf]
        %v385 = vld [vmem:[#allocation5 + $0xb0] sm:$0xf]
        %v386 = vld [vmem:[#allocation5 + $0xb4] sm:$0xf]
        %v387 = vld [vmem:[#allocation5 + $0xb8] sm:$0xf]
        %v388 = vld [vmem:[#allocation5 + $0xbc] sm:$0xf]
        %v389 = vld [vmem:[#allocation5 + $0xc0] sm:$0xf]
        %v390 = vld [vmem:[#allocation5 + $0xc4] sm:$0xf]
        %v391 = vld [vmem:[#allocation5 + $0xc8] sm:$0xf]
        %v392 = vld [vmem:[#allocation5 + $0xcc] sm:$0xf]
        %v393 = vld [vmem:[#allocation5 + $0xd0] sm:$0xf]
        %v394 = vld [vmem:[#allocation5 + $0xd4] sm:$0xf]
        %v395 = vld [vmem:[#allocation5 + $0xd8] sm:$0xf]
        %v396 = vld [vmem:[#allocation5 + $0xdc] sm:$0xf]
        %v397 = vld [vmem:[#allocation5 + $0xe0] sm:$0xf]
        %v398 = vld [vmem:[#allocation5 + $0xe4] sm:$0xf]
        %v399 = vld [vmem:[#allocation5 + $0xe8] sm:$0xf]
        %v400 = vld [vmem:[#allocation5 + $0xec] sm:$0xf]
        %v401 = vld [vmem:[#allocation5 + $0xf0] sm:$0xf]
        %v402 = vld [vmem:[#allocation5 + $0xf4] sm:$0xf]
        %v403 = vld [vmem:[#allocation5 + $0xf8] sm:$0xf]
        %v404 = vld [vmem:[#allocation5 + $0xfc] sm:$0xf]
        %v405 = vld [vmem:[#allocation5 + $0x100] sm:$0xf]
        %v406 = vld [vmem:[#allocation5 + $0x104] sm:$0xf]
        %v407 = vld [vmem:[#allocation5 + $0x108] sm:$0xf]
        %v408 = vld [vmem:[#allocation5 + $0x10c] sm:$0xf]
        %v409 = vld [vmem:[#allocation5 + $0x110] sm:$0xf]
        %v410 = vld [vmem:[#allocation5 + $0x114] sm:$0xf]
        %v411 = vld [vmem:[#allocation5 + $0x118] sm:$0xf]
        %v412 = vld [vmem:[#allocation5 + $0x11c] sm:$0xf]
        %v413 = vld [vmem:[#allocation5 + $0x120] sm:$0xf]
        %v414 = vld [vmem:[#allocation5 + $0x124] sm:$0xf]
        %v415 = vld [vmem:[#allocation5 + $0x128] sm:$0xf]
        %v416 = vld [vmem:[#allocation5 + $0x12c] sm:$0xf]
        %v417 = vld [vmem:[#allocation5 + $0x130] sm:$0xf]
        %v418 = vld [vmem:[#allocation5 + $0x134] sm:$0xf]
        %v419 = vld [vmem:[#allocation5 + $0x138] sm:$0xf]
        %v420 = vld [vmem:[#allocation5 + $0x13c] sm:$0xf]
        %v421 = vld [vmem:[#allocation5 + $0x140] sm:$0xf]
        %v422 = vld [vmem:[#allocation5 + $0x144] sm:$0xf]
        %v423 = vld [vmem:[#allocation5 + $0x148] sm:$0xf]
        %v424 = vld [vmem:[#allocation5 + $0x14c] sm:$0xf]
        %v425 = vld [vmem:[#allocation5 + $0x150] sm:$0xf]
        %v426 = vld [vmem:[#allocation5 + $0x154] sm:$0xf]
        %v427 = vld [vmem:[#allocation5 + $0x158] sm:$0xf]
        %v428 = vld [vmem:[#allocation5 + $0x15c] sm:$0xf]
        %v429 = vld [vmem:[#allocation5 + $0x160] sm:$0xf]
        %v430 = vld [vmem:[#allocation5 + $0x164] sm:$0xf]
        %v431 = vld [vmem:[#allocation5 + $0x168] sm:$0xf]
        %v432 = vld [vmem:[#allocation5 + $0x16c] sm:$0xf]
        %v433 = vld [vmem:[#allocation5 + $0x170] sm:$0xf]
        %v434 = vld [vmem:[#allocation5 + $0x174] sm:$0xf]
        %v435 = vld [vmem:[#allocation5 + $0x178] sm:$0xf]
        %v436 = vld [vmem:[#allocation5 + $0x17c] sm:$0xf]
        %v437 = vld [vmem:[#allocation5 + $0x180] sm:$0xf]
        %v438 = vld [vmem:[#allocation5 + $0x184] sm:$0xf]
        %v439 = vld [vmem:[#allocation5 + $0x188] sm:$0xf]
        %v440 = vld [vmem:[#allocation5 + $0x18c] sm:$0xf]
        %v441 = vld [vmem:[#allocation5 + $0x190] sm:$0xf]
        %v442 = vld [vmem:[#allocation5 + $0x194] sm:$0xf]
        %v443 = vld [vmem:[#allocation5 + $0x198] sm:$0xf]
        %v444 = vld [vmem:[#allocation5 + $0x19c] sm:$0xf]
        %v445 = vld [vmem:[#allocation5 + $0x1a0] sm:$0xf]
        %v446 = vld [vmem:[#allocation5 + $0x1a4] sm:$0xf]
        %v447 = vld [vmem:[#allocation5 + $0x1a8] sm:$0xf]
        %v448 = vld [vmem:[#allocation5 + $0x1ac] sm:$0xf]
        %v449 = vld [vmem:[#allocation5 + $0x1b0] sm:$0xf]
        %v450 = vld [vmem:[#allocation5 + $0x1b4] sm:$0xf]
        %v451 = vld [vmem:[#allocation5 + $0x1b8] sm:$0xf]
        %v452 = vld [vmem:[#allocation5 + $0x1bc] sm:$0xf]
        %v453 = vld [vmem:[#allocation5 + $0x1c0] sm:$0xf]
        %v454 = vld [vmem:[#allocation5 + $0x1c4] sm:$0xf]
        %v455 = vld [vmem:[#allocation5 + $0x1c8] sm:$0xf]
        %v456 = vld [vmem:[#allocation5 + $0x1cc] sm:$0xf]
        %v457 = vld [vmem:[#allocation5 + $0x1d0] sm:$0xf]
        %v458 = vld [vmem:[#allocation5 + $0x1d4] sm:$0xf]
        %v459 = vld [vmem:[#allocation5 + $0x1d8] sm:$0xf]
        %v460 = vld [vmem:[#allocation5 + $0x1dc] sm:$0xf]
        %v461 = vld [vmem:[#allocation5 + $0x1e0] sm:$0xf]
        %v462 = vld [vmem:[#allocation5 + $0x1e4] sm:$0xf]
        %v463 = vld [vmem:[#allocation5 + $0x1e8] sm:$0xf]
        %v464 = vld [vmem:[#allocation5 + $0x1ec] sm:$0xf]
        %v465 = vld [vmem:[#allocation5 + $0x1f0] sm:$0xf]
        %v466 = vld [vmem:[#allocation5 + $0x1f4] sm:$0xf]
        %v467 = vld [vmem:[#allocation5 + $0x1f8] sm:$0xf]
        %v468 = vld [vmem:[#allocation5 + $0x1fc] sm:$0xf]
        %v473 = vunpack.c.l.b16 %v336
        %v474 = vunpack.c.h.b16 %v336
        %v475 = vunpack.c.l.b16 %v337
        %v476 = vunpack.c.h.b16 %v337
        %v477 = vunpack.c.l.b16 %v338
        %v478 = vunpack.c.h.b16 %v338
        %v479 = vunpack.c.l.b16 %v339
        %v480 = vunpack.c.h.b16 %v339
        %v481 = vpack.c.b16 %v473, %v473
        %v482 = vpack.c.b16 %v474, %v474
        %v483 = vpack.c.b16 %v475, %v475
        %v484 = vpack.c.b16 %v476, %v476
        %v485 = vpack.c.b16 %v477, %v477
        %v486 = vpack.c.b16 %v478, %v478
        %v487 = vpack.c.b16 %v479, %v479
        %v488 = vpack.c.b16 %v480, %v480
        %v625 = vunpack.c.l.b16 %v341
        %v626 = vunpack.c.l.b16 %v342
        %v627 = vunpack.c.l.b16 %v343
        %v628 = vunpack.c.l.b16 %v344
        %v629 = vunpack.c.l.b16 %v345
        %v630 = vunpack.c.l.b16 %v346
        %v631 = vunpack.c.l.b16 %v347
        %v632 = vunpack.c.l.b16 %v348
        %v633 = vunpack.c.l.b16 %v349
        %v634 = vunpack.c.l.b16 %v350
        %v635 = vunpack.c.l.b16 %v351
        %v636 = vunpack.c.l.b16 %v352
        %v637 = vunpack.c.l.b16 %v353
        %v638 = vunpack.c.l.b16 %v354
        %v639 = vunpack.c.l.b16 %v355
        %v640 = vunpack.c.l.b16 %v356
        %v641 = vunpack.c.l.b16 %v357
        %v642 = vunpack.c.l.b16 %v358
        %v643 = vunpack.c.l.b16 %v359
        %v644 = vunpack.c.l.b16 %v360
        %v645 = vunpack.c.l.b16 %v361
        %v646 = vunpack.c.l.b16 %v362
        %v647 = vunpack.c.l.b16 %v363
        %v648 = vunpack.c.l.b16 %v364
        %v649 = vunpack.c.l.b16 %v365
        %v650 = vunpack.c.l.b16 %v366
        %v651 = vunpack.c.l.b16 %v367
        %v652 = vunpack.c.l.b16 %v368
        %v653 = vunpack.c.l.b16 %v369
        %v654 = vunpack.c.l.b16 %v370
        %v655 = vunpack.c.l.b16 %v371
        %v656 = vunpack.c.l.b16 %v372
        %v657 = vunpack.c.l.b16 %v373
        %v658 = vunpack.c.l.b16 %v374
        %v659 = vunpack.c.l.b16 %v375
        %v660 = vunpack.c.l.b16 %v376
        %v661 = vunpack.c.l.b16 %v377
        %v662 = vunpack.c.l.b16 %v378
        %v663 = vunpack.c.l.b16 %v379
        %v664 = vunpack.c.l.b16 %v380
        %v665 = vunpack.c.l.b16 %v381
        %v666 = vunpack.c.l.b16 %v382
        %v667 = vunpack.c.l.b16 %v383
        %v668 = vunpack.c.l.b16 %v384
        %v669 = vunpack.c.l.b16 %v385
        %v670 = vunpack.c.l.b16 %v386
        %v671 = vunpack.c.l.b16 %v387
        %v672 = vunpack.c.l.b16 %v388
        %v673 = vunpack.c.l.b16 %v389
        %v674 = vunpack.c.l.b16 %v390
        %v675 = vunpack.c.l.b16 %v391
        %v676 = vunpack.c.l.b16 %v392
        %v677 = vunpack.c.l.b16 %v393
        %v678 = vunpack.c.l.b16 %v394
        %v679 = vunpack.c.l.b16 %v395
        %v680 = vunpack.c.l.b16 %v396
        %v681 = vunpack.c.l.b16 %v397
        %v682 = vunpack.c.l.b16 %v398
        %v683 = vunpack.c.l.b16 %v399
        %v684 = vunpack.c.l.b16 %v400
        %v685 = vunpack.c.l.b16 %v401
        %v686 = vunpack.c.l.b16 %v402
        %v687 = vunpack.c.l.b16 %v403
        %v688 = vunpack.c.l.b16 %v404
        %v689 = vunpack.c.l.b16 %v405
        %v690 = vunpack.c.l.b16 %v406
        %v691 = vunpack.c.l.b16 %v407
        %v692 = vunpack.c.l.b16 %v408
        %v693 = vunpack.c.l.b16 %v409
        %v694 = vunpack.c.l.b16 %v410
        %v695 = vunpack.c.l.b16 %v411
        %v696 = vunpack.c.l.b16 %v412
        %v697 = vunpack.c.l.b16 %v413
        %v698 = vunpack.c.l.b16 %v414
        %v699 = vunpack.c.l.b16 %v415
        %v700 = vunpack.c.l.b16 %v416
        %v701 = vunpack.c.l.b16 %v417
        %v702 = vunpack.c.l.b16 %v418
        %v703 = vunpack.c.l.b16 %v419
        %v704 = vunpack.c.l.b16 %v420
        %v705 = vunpack.c.l.b16 %v421
        %v706 = vunpack.c.l.b16 %v422
        %v707 = vunpack.c.l.b16 %v423
        %v708 = vunpack.c.l.b16 %v424
        %v709 = vunpack.c.l.b16 %v425
        %v710 = vunpack.c.l.b16 %v426
        %v711 = vunpack.c.l.b16 %v427
        %v712 = vunpack.c.l.b16 %v428
        %v713 = vunpack.c.l.b16 %v429
        %v714 = vunpack.c.l.b16 %v430
        %v715 = vunpack.c.l.b16 %v431
        %v716 = vunpack.c.l.b16 %v432
        %v717 = vunpack.c.l.b16 %v433
        %v718 = vunpack.c.l.b16 %v434
        %v719 = vunpack.c.l.b16 %v435
        %v720 = vunpack.c.l.b16 %v436
        %v721 = vunpack.c.l.b16 %v437
        %v722 = vunpack.c.l.b16 %v438
        %v723 = vunpack.c.l.b16 %v439
        %v724 = vunpack.c.l.b16 %v440
        %v725 = vunpack.c.l.b16 %v441
        %v726 = vunpack.c.l.b16 %v442
        %v727 = vunpack.c.l.b16 %v443
        %v728 = vunpack.c.l.b16 %v444
        %v729 = vunpack.c.l.b16 %v445
        %v730 = vunpack.c.l.b16 %v446
        %v731 = vunpack.c.l.b16 %v447
        %v732 = vunpack.c.l.b16 %v448
        %v733 = vunpack.c.l.b16 %v449
        %v734 = vunpack.c.l.b16 %v450
        %v735 = vunpack.c.l.b16 %v451
        %v736 = vunpack.c.l.b16 %v452
        %v737 = vunpack.c.l.b16 %v453
        %v738 = vunpack.c.l.b16 %v454
        %v739 = vunpack.c.l.b16 %v455
        %v740 = vunpack.c.l.b16 %v456
        %v741 = vunpack.c.l.b16 %v457
        %v742 = vunpack.c.l.b16 %v458
        %v743 = vunpack.c.l.b16 %v459
        %v744 = vunpack.c.l.b16 %v460
        %v745 = vunpack.c.l.b16 %v461
        %v746 = vunpack.c.l.b16 %v462
        %v747 = vunpack.c.l.b16 %v463
        %v748 = vunpack.c.l.b16 %v464
        %v749 = vunpack.c.l.b16 %v465
        %v750 = vunpack.c.l.b16 %v466
        %v751 = vunpack.c.l.b16 %v467
        %v752 = vunpack.c.l.b16 %v468
        %v753 = vpack.c.b16 %v626, %v625
        %v754 = vpack.c.b16 %v628, %v627
        %v755 = vpack.c.b16 %v630, %v629
        %v756 = vpack.c.b16 %v632, %v631
        %v757 = vpack.c.b16 %v634, %v633
        %v758 = vpack.c.b16 %v636, %v635
        %v759 = vpack.c.b16 %v638, %v637
        %v760 = vpack.c.b16 %v640, %v639
        %v761 = vpack.c.b16 %v642, %v641
        %v762 = vpack.c.b16 %v644, %v643
        %v763 = vpack.c.b16 %v646, %v645
        %v764 = vpack.c.b16 %v648, %v647
        %v765 = vpack.c.b16 %v650, %v649
        %v766 = vpack.c.b16 %v652, %v651
        %v767 = vpack.c.b16 %v654, %v653
        %v768 = vpack.c.b16 %v656, %v655
        %v769 = vpack.c.b16 %v658, %v657
        %v770 = vpack.c.b16 %v660, %v659
        %v771 = vpack.c.b16 %v662, %v661
        %v772 = vpack.c.b16 %v664, %v663
        %v773 = vpack.c.b16 %v666, %v665
        %v774 = vpack.c.b16 %v668, %v667
        %v775 = vpack.c.b16 %v670, %v669
        %v776 = vpack.c.b16 %v672, %v671
        %v777 = vpack.c.b16 %v674, %v673
        %v778 = vpack.c.b16 %v676, %v675
        %v779 = vpack.c.b16 %v678, %v677
        %v780 = vpack.c.b16 %v680, %v679
        %v781 = vpack.c.b16 %v682, %v681
        %v782 = vpack.c.b16 %v684, %v683
        %v783 = vpack.c.b16 %v686, %v685
        %v784 = vpack.c.b16 %v688, %v687
        %v785 = vpack.c.b16 %v690, %v689
        %v786 = vpack.c.b16 %v692, %v691
        %v787 = vpack.c.b16 %v694, %v693
        %v788 = vpack.c.b16 %v696, %v695
        %v789 = vpack.c.b16 %v698, %v697
        %v790 = vpack.c.b16 %v700, %v699
        %v791 = vpack.c.b16 %v702, %v701
        %v792 = vpack.c.b16 %v704, %v703
        %v793 = vpack.c.b16 %v706, %v705
        %v794 = vpack.c.b16 %v708, %v707
        %v795 = vpack.c.b16 %v710, %v709
        %v796 = vpack.c.b16 %v712, %v711
        %v797 = vpack.c.b16 %v714, %v713
        %v798 = vpack.c.b16 %v716, %v715
        %v799 = vpack.c.b16 %v718, %v717
        %v800 = vpack.c.b16 %v720, %v719
        %v801 = vpack.c.b16 %v722, %v721
        %v802 = vpack.c.b16 %v724, %v723
        %v803 = vpack.c.b16 %v726, %v725
        %v804 = vpack.c.b16 %v728, %v727
        %v805 = vpack.c.b16 %v730, %v729
        %v806 = vpack.c.b16 %v732, %v731
        %v807 = vpack.c.b16 %v734, %v733
        %v808 = vpack.c.b16 %v736, %v735
        %v809 = vpack.c.b16 %v738, %v737
        %v810 = vpack.c.b16 %v740, %v739
        %v811 = vpack.c.b16 %v742, %v741
        %v812 = vpack.c.b16 %v744, %v743
        %v813 = vpack.c.b16 %v746, %v745
        %v814 = vpack.c.b16 %v748, %v747
        %v815 = vpack.c.b16 %v750, %v749
        %v816 = vpack.c.b16 %v752, %v751
        %881 = vmatprep.subr.bf16.mxu0 0
        %882 = vmatpush1.bf16.msra.mxu0 %v760
        %883 = vmatprep.subr.bf16.mxu0 0
        %884 = vmatpush1.bf16.msra.mxu0 %v759
        %885 = vmatprep.subr.bf16.mxu0 0
        %886 = vmatpush1.bf16.msra.mxu0 %v758
        %887 = vmatprep.subr.bf16.mxu0 0
        %888 = vmatpush1.bf16.msra.mxu0 %v757
        %889 = vmatprep.subr.bf16.mxu0 0
        %890 = vmatpush1.bf16.msra.mxu0 %v756
        %891 = vmatprep.subr.bf16.mxu0 0
        %892 = vmatpush1.bf16.msra.mxu0 %v755
        %893 = vmatprep.subr.bf16.mxu0 0
        %894 = vmatpush1.bf16.msra.mxu0 %v754
        %895 = vmatprep.subr.bf16.mxu0 0
        %896 = vmatpush1.bf16.msra.mxu0 %v753
        %897 = vmatprep.subr.bf16.mxu0 0
        %898 = vmatpush2.bf16.msra.mxu0 %v768
        %899 = vmatprep.subr.bf16.mxu0 0
        %900 = vmatpush2.bf16.msra.mxu0 %v767
        %901 = vmatprep.subr.bf16.mxu0 0
        %902 = vmatpush2.bf16.msra.mxu0 %v766
        %903 = vmatprep.subr.bf16.mxu0 0
        %904 = vmatpush2.bf16.msra.mxu0 %v765
        %905 = vmatprep.subr.bf16.mxu0 0
        %906 = vmatpush2.bf16.msra.mxu0 %v764
        %907 = vmatprep.subr.bf16.mxu0 0
        %908 = vmatpush2.bf16.msra.mxu0 %v763
        %909 = vmatprep.subr.bf16.mxu0 0
        %910 = vmatpush2.bf16.msra.mxu0 %v762
        %911 = vmatprep.subr.bf16.mxu0 0
        %912 = vmatpush2.bf16.msra.mxu0 %v761
        %913 = vmatprep.mubr.bf16.mxu0 %v482
        %914 = vmatmul.mubr.bf16.gmra.mxu0 %v481
        %v915 = vpop.f32.mrf.mxu0
        %v916 = vadd.f32 0.0, %v915
        %v917 = vpop.f32.mrf.mxu0
        %v918 = vpop.f32.mrf.mxu0
        %v919 = vpop.f32.mrf.mxu0
        %920 = vdwg.mxu0
        %921 = vmatprep.subr.bf16.mxu0 0
        %922 = vmatpush1.bf16.msra.mxu0 %v776
        %923 = vmatprep.subr.bf16.mxu0 0
        %924 = vmatpush1.bf16.msra.mxu0 %v775
        %925 = vmatprep.subr.bf16.mxu0 0
        %926 = vmatpush1.bf16.msra.mxu0 %v774
        %927 = vmatprep.subr.bf16.mxu0 0
        %928 = vmatpush1.bf16.msra.mxu0 %v773
        %929 = vmatprep.subr.bf16.mxu0 0
        %930 = vmatpush1.bf16.msra.mxu0 %v772
        %931 = vmatprep.subr.bf16.mxu0 0
        %932 = vmatpush1.bf16.msra.mxu0 %v771
        %933 = vmatprep.subr.bf16.mxu0 0
        %934 = vmatpush1.bf16.msra.mxu0 %v770
        %935 = vmatprep.subr.bf16.mxu0 0
        %936 = vmatpush1.bf16.msra.mxu0 %v769
        %937 = vmatprep.subr.bf16.mxu0 0
        %938 = vmatpush2.bf16.msra.mxu0 %v784
        %939 = vmatprep.subr.bf16.mxu0 0
        %940 = vmatpush2.bf16.msra.mxu0 %v783
        %941 = vmatprep.subr.bf16.mxu0 0
        %942 = vmatpush2.bf16.msra.mxu0 %v782
        %943 = vmatprep.subr.bf16.mxu0 0
        %944 = vmatpush2.bf16.msra.mxu0 %v781
        %945 = vmatprep.subr.bf16.mxu0 0
        %946 = vmatpush2.bf16.msra.mxu0 %v780
        %947 = vmatprep.subr.bf16.mxu0 0
        %948 = vmatpush2.bf16.msra.mxu0 %v779
        %949 = vmatprep.subr.bf16.mxu0 0
        %950 = vmatpush2.bf16.msra.mxu0 %v778
        %951 = vmatprep.subr.bf16.mxu0 0
        %952 = vmatpush2.bf16.msra.mxu0 %v777
        %953 = vmatprep.mubr.bf16.mxu0 %v484
        %954 = vmatmul.mubr.bf16.gmra.mxu0 %v483
        %v955 = vpop.f32.mrf.mxu0
        %v956 = vadd.f32 %v916, %v955
        %v957 = vpop.f32.mrf.mxu0
        %v958 = vpop.f32.mrf.mxu0
        %v959 = vpop.f32.mrf.mxu0
        %960 = vdwg.mxu0
        %961 = vmatprep.subr.bf16.mxu0 0
        %962 = vmatpush1.bf16.msra.mxu0 %v792
        %963 = vmatprep.subr.bf16.mxu0 0
        %964 = vmatpush1.bf16.msra.mxu0 %v791
        %965 = vmatprep.subr.bf16.mxu0 0
        %966 = vmatpush1.bf16.msra.mxu0 %v790
        %967 = vmatprep.subr.bf16.mxu0 0
        %968 = vmatpush1.bf16.msra.mxu0 %v789
        %969 = vmatprep.subr.bf16.mxu0 0
        %970 = vmatpush1.bf16.msra.mxu0 %v788
        %971 = vmatprep.subr.bf16.mxu0 0
        %972 = vmatpush1.bf16.msra.mxu0 %v787
        %973 = vmatprep.subr.bf16.mxu0 0
        %974 = vmatpush1.bf16.msra.mxu0 %v786
        %975 = vmatprep.subr.bf16.mxu0 0
        %976 = vmatpush1.bf16.msra.mxu0 %v785
        %977 = vmatprep.subr.bf16.mxu0 0
        %978 = vmatpush2.bf16.msra.mxu0 %v800
        %979 = vmatprep.subr.bf16.mxu0 0
        %980 = vmatpush2.bf16.msra.mxu0 %v799
        %981 = vmatprep.subr.bf16.mxu0 0
        %982 = vmatpush2.bf16.msra.mxu0 %v798
        %983 = vmatprep.subr.bf16.mxu0 0
        %984 = vmatpush2.bf16.msra.mxu0 %v797
        %985 = vmatprep.subr.bf16.mxu0 0
        %986 = vmatpush2.bf16.msra.mxu0 %v796
        %987 = vmatprep.subr.bf16.mxu0 0
        %988 = vmatpush2.bf16.msra.mxu0 %v795
        %989 = vmatprep.subr.bf16.mxu0 0
        %990 = vmatpush2.bf16.msra.mxu0 %v794
        %991 = vmatprep.subr.bf16.mxu0 0
        %992 = vmatpush2.bf16.msra.mxu0 %v793
        %993 = vmatprep.mubr.bf16.mxu0 %v486
        %994 = vmatmul.mubr.bf16.gmra.mxu0 %v485
        %v995 = vpop.f32.mrf.mxu0
        %v996 = vadd.f32 %v956, %v995
        %v997 = vpop.f32.mrf.mxu0
        %v998 = vpop.f32.mrf.mxu0
        %v999 = vpop.f32.mrf.mxu0
        %1000 = vdwg.mxu0
        %1001 = vmatprep.subr.bf16.mxu0 0
        %1002 = vmatpush1.bf16.msra.mxu0 %v808
        %1003 = vmatprep.subr.bf16.mxu0 0
        %1004 = vmatpush1.bf16.msra.mxu0 %v807
        %1005 = vmatprep.subr.bf16.mxu0 0
        %1006 = vmatpush1.bf16.msra.mxu0 %v806
        %1007 = vmatprep.subr.bf16.mxu0 0
        %1008 = vmatpush1.bf16.msra.mxu0 %v805
        %1009 = vmatprep.subr.bf16.mxu0 0
        %1010 = vmatpush1.bf16.msra.mxu0 %v804
        %1011 = vmatprep.subr.bf16.mxu0 0
        %1012 = vmatpush1.bf16.msra.mxu0 %v803
        %1013 = vmatprep.subr.bf16.mxu0 0
        %1014 = vmatpush1.bf16.msra.mxu0 %v802
        %1015 = vmatprep.subr.bf16.mxu0 0
        %1016 = vmatpush1.bf16.msra.mxu0 %v801
        %1017 = vmatprep.subr.bf16.mxu0 0
        %1018 = vmatpush2.bf16.msra.mxu0 %v816
        %1019 = vmatprep.subr.bf16.mxu0 0
        %1020 = vmatpush2.bf16.msra.mxu0 %v815
        %1021 = vmatprep.subr.bf16.mxu0 0
        %1022 = vmatpush2.bf16.msra.mxu0 %v814
        %1023 = vmatprep.subr.bf16.mxu0 0
        %1024 = vmatpush2.bf16.msra.mxu0 %v813
        %1025 = vmatprep.subr.bf16.mxu0 0
        %1026 = vmatpush2.bf16.msra.mxu0 %v812
        %1027 = vmatprep.subr.bf16.mxu0 0
        %1028 = vmatpush2.bf16.msra.mxu0 %v811
        %1029 = vmatprep.subr.bf16.mxu0 0
        %1030 = vmatpush2.bf16.msra.mxu0 %v810
        %1031 = vmatprep.subr.bf16.mxu0 0
        %1032 = vmatpush2.bf16.msra.mxu0 %v809
        %1033 = vmatprep.mubr.bf16.mxu0 %v488
        %1034 = vmatmul.mubr.bf16.gmra.mxu0 %v487
        %v1035 = vpop.f32.mrf.mxu0
        %v1036 = vadd.f32 %v996, %v1035
        %v1037 = vpop.f32.mrf.mxu0
        %v1038 = vpop.f32.mrf.mxu0
        %v1039 = vpop.f32.mrf.mxu0
        %1040 = vdwg.mxu0
        %v1041 = vadd.f32 %v340, %v1036
        %1042 = vst [vmem:[%s327] sm:$0xff] %v1041
        // Predicated region
        $region61: #{tpu_custom_call.1} parent=39 // pred_check
          %p1043 = pneg %p331
        $region62: #{tpu_custom_call.1} parent=39 // pred_check_branch
          %1045 = sbr.rel (%p1043) target = $region64
        $region63: #{tpu_custom_call.1} parent=39 // pred_region
          %v1046 = vld [vmem:[%s4] sm:$0xf]
          %v1047 = vld [vmem:[%s327] sm:$0xff]
          %v1048 = vlaneseq
          %v1049 = vshrl.u32 %v1048, 7
          %v1050 = vsub.s32 0, %v1049
          %v1051 = vrot.slane %v1046, %v1050
          %v1052 = vadd.f32 %v1047, %v1051
          %v1053 = vmax.f32 %v1052, 0.0
          %v1054 = vld [vmem:[%s292] sm:$0xf]
          %v1055 = vld [vmem:[#allocation8] sm:$0xf]
          %v1056 = vld [vmem:[#allocation8 + $0x4] sm:$0xf]
          %v1057 = vld [vmem:[#allocation8 + $0x8] sm:$0xf]
          %v1058 = vld [vmem:[#allocation8 + $0xc] sm:$0xf]
          %v1059 = vld [vmem:[#allocation8 + $0x10] sm:$0xf]
          %v1060 = vld [vmem:[#allocation8 + $0x14] sm:$0xf]
          %v1061 = vld [vmem:[#allocation8 + $0x18] sm:$0xf]
          %v1062 = vld [vmem:[#allocation8 + $0x1c] sm:$0xf]
          %v1063 = vld [vmem:[#allocation8 + $0x20] sm:$0xf]
          %v1064 = vld [vmem:[#allocation8 + $0x24] sm:$0xf]
          %v1065 = vld [vmem:[#allocation8 + $0x28] sm:$0xf]
          %v1066 = vld [vmem:[#allocation8 + $0x2c] sm:$0xf]
          %v1067 = vld [vmem:[#allocation8 + $0x30] sm:$0xf]
          %v1068 = vld [vmem:[#allocation8 + $0x34] sm:$0xf]
          %v1069 = vld [vmem:[#allocation8 + $0x38] sm:$0xf]
          %v1070 = vld [vmem:[#allocation8 + $0x3c] sm:$0xf]
          %v1071 = vlaneseq
          %v1072 = vshrl.u32 %v1071, 7
          %v1073 = vsub.s32 1, %v1072
          %v1074 = vrot.slane %v1046, %v1073
          %v1091 = vunpack.c.l.b16 %v1055
          %v1092 = vunpack.c.l.b16 %v1056
          %v1093 = vunpack.c.l.b16 %v1057
          %v1094 = vunpack.c.l.b16 %v1058
          %v1095 = vunpack.c.l.b16 %v1059
          %v1096 = vunpack.c.l.b16 %v1060
          %v1097 = vunpack.c.l.b16 %v1061
          %v1098 = vunpack.c.l.b16 %v1062
          %v1099 = vunpack.c.l.b16 %v1063
          %v1100 = vunpack.c.l.b16 %v1064
          %v1101 = vunpack.c.l.b16 %v1065
          %v1102 = vunpack.c.l.b16 %v1066
          %v1103 = vunpack.c.l.b16 %v1067
          %v1104 = vunpack.c.l.b16 %v1068
          %v1105 = vunpack.c.l.b16 %v1069
          %v1106 = vunpack.c.l.b16 %v1070
          %v1107 = vpack.c.b16 %v1092, %v1091
          %v1108 = vpack.c.b16 %v1094, %v1093
          %v1109 = vpack.c.b16 %v1096, %v1095
          %v1110 = vpack.c.b16 %v1098, %v1097
          %v1111 = vpack.c.b16 %v1100, %v1099
          %v1112 = vpack.c.b16 %v1102, %v1101
          %v1113 = vpack.c.b16 %v1104, %v1103
          %v1114 = vpack.c.b16 %v1106, %v1105
          %1123 = vmatprep.subr.bf16.mxu0 0
          %1124 = vmatpush1.bf16.msra.mxu0 %v1114
          %1125 = vmatprep.subr.bf16.mxu0 0
          %1126 = vmatpush1.bf16.msra.mxu0 %v1113
          %1127 = vmatprep.subr.bf16.mxu0 0
          %1128 = vmatpush1.bf16.msra.mxu0 %v1112
          %1129 = vmatprep.subr.bf16.mxu0 0
          %1130 = vmatpush1.bf16.msra.mxu0 %v1111
          %1131 = vmatprep.subr.bf16.mxu0 0
          %1132 = vmatpush1.bf16.msra.mxu0 %v1110
          %1133 = vmatprep.subr.bf16.mxu0 0
          %1134 = vmatpush1.bf16.msra.mxu0 %v1109
          %1135 = vmatprep.subr.bf16.mxu0 0
          %1136 = vmatpush1.bf16.msra.mxu0 %v1108
          %1137 = vmatprep.subr.bf16.mxu0 0
          %1138 = vmatpush1.bf16.msra.mxu0 %v1107
          %1139 = vmatprep.subr.bf16.mxu0 0
          %1140 = vmatpush2.bf16.msra.mxu0 0
          %1141 = vmatprep.subr.bf16.mxu0 0
          %1142 = vmatpush2.bf16.msra.mxu0 0
          %1143 = vmatprep.subr.bf16.mxu0 0
          %1144 = vmatpush2.bf16.msra.mxu0 0
          %1145 = vmatprep.subr.bf16.mxu0 0
          %1146 = vmatpush2.bf16.msra.mxu0 0
          %1147 = vmatprep.subr.bf16.mxu0 0
          %1148 = vmatpush2.bf16.msra.mxu0 0
          %1149 = vmatprep.subr.bf16.mxu0 0
          %1150 = vmatpush2.bf16.msra.mxu0 0
          %1151 = vmatprep.subr.bf16.mxu0 0
          %1152 = vmatpush2.bf16.msra.mxu0 0
          %1153 = vmatprep.subr.bf16.mxu0 0
          %1154 = vmatpush2.bf16.msra.mxu0 0
          %1155 = vmatprep.mubr.bf16.mxu0 0
          %1156 = vmatmul.mubr.bf16.gmra.mxu0 %v1054
          %v1157 = vpop.f32.mrf.mxu0
          %v1158 = vadd.f32 %v1074, %v1157
          %v1159 = vpop.f32.mrf.mxu0
          %v1160 = vpop.f32.mrf.mxu0
          %v1161 = vpop.f32.mrf.mxu0
          %1162 = vdwg.mxu0
          %v1163 = vmax.f32 %v1158, 0.0
          %v1164 = vadd.f32 %v1053, %v1163
          %v1165 = vlaneseq
          %v1166 = vshrl.u32 %v1165, 7
          %v1167 = vsub.s32 2, %v1166
          %v1168 = vrot.slane %v1046, %v1167
          %v1169 = vmul.f32 %v1164, %v1168
          %v1170 = vlaneseq
          %v1171 = vshrl.u32 %v1170, 7
          %v1172 = vsub.s32 3, %v1171
          %v1173 = vrot.slane %v1046, %v1172
          %v1174 = vadd.f32 %v1169, %v1173
          %1175 = vst [vmem:[%s327] sm:$0xff] %v1174
        $region64: #{tpu_custom_call.1} parent=39 // pred_fallthru
          _
        %s1176 = sand.u32 %s165, 1
        %s1177 = scalar_lea.sflag [#allocation4], %s1176
        %s1178 = sand.u32 %s165, 1
        %s1179 = smul.addr %s1178, 8
        %s1180 = scalar_lea.vmem [#allocation9], %s1179
        // Predicated region
        $region65: #{tpu_custom_call.1} parent=39 // pred_check
          %p1181 = pneg %p175
        $region66: #{tpu_custom_call.1} parent=39 // pred_check_branch
          %1183 = sbr.rel (%p1181) target = $region68
        $region67: #{tpu_custom_call.1} parent=39 // pred_region
          %s1185 = ssub.s32 128, 128
          %1186 = vsyncadd %s1177, %s1185
          %s1187 = smul.addr %s27, 128
          %s1188 = scalar_lea.hbm %s5, %s1187
          %s1190 = sshll.u32 %s1180, 4
          %s1191 = int_to_ptr.vmem [resolvable:$true] %s1190
          %1193 = dma.vmem_to_hbm [thread:$0]  %s1191, 128, %s1188, %s1177
        $region68: #{tpu_custom_call.1} parent=39 // pred_fallthru
          _
      $region40: #{tpu_custom_call.1} parent=5 // pred_fallthru
        _
      %p1194 = scmp.le.s32.totalorder 2, %s18
      // Predicated region
      $region69: #{tpu_custom_call.1} parent=5 // pred_check
        %p1195 = pneg %p1194
      $region70: #{tpu_custom_call.1} parent=5 // pred_check_branch
        %1197 = sbr.rel (%p1195) target = $region72
      $region71: #{tpu_custom_call.1} parent=5 // pred_region
        %s1198 = ssub.s32 %s18, 2
        // Predicated region
        $region73: #{tpu_custom_call.1} parent=71 // pred_check
          %p1199 = pneg %p181
        $region74: #{tpu_custom_call.1} parent=71 // pred_check_branch
          %1201 = sbr.rel (%p1199) target = $region76
        $region75: #{tpu_custom_call.1} parent=71 // pred_region
          %s1202 = sand.u32 %s166, 1
          %s1203 = scalar_lea.sflag [#allocation4], %s1202
          %s1204 = sand.u32 %s166, 1
          %s1205 = smul.addr %s1204, 8
          %s1206 = scalar_lea.vmem [#allocation9], %s1205
          %1207 = dma.done %s1203, 128
        $region76: #{tpu_custom_call.1} parent=71 // pred_fallthru
          _
      $region72: #{tpu_custom_call.1} parent=5 // pred_fallthru
        _
    $region6: #{tpu_custom_call.1} parent=1 // loop_footer
      %s22 = sadd.s32 1, %s18
    $region7: #{tpu_custom_call.1} parent=1 // loop_footer_branch
      %17 = sbr.rel target = $region3
    $region8: #{tpu_custom_call.1} parent=1 // loop_exit
      _
    %1208 = vsyncpa [#allocation3], 1
    %s1209 = scalar_lea.sflag [#allocation3], 1
    %1210 = vsyncpa %s1209, 1
    %1211 = vsyncpa [#allocation6], 1
    %1212 = vsyncpa [#allocation4], 1
    %s1213 = scalar_lea.sflag [#allocation4], 1
    %1214 = vsyncpa %s1213, 1

</llo_original>
